<compile_context>
chip_gen: v6e
topology: v6e:2x2x1
jax: 0.10.0
libtpu: 0.0.40
codegen_flags: <defaults>
</compile_context>

<pallas_src>
import functools

import jax
import jax.numpy as jnp
from jax.experimental import pallas as pl
from jax.experimental.pallas import tpu as pltpu


def _round_up(x: int, m: int) -> int:
    return ((x + m - 1) // m) * m


# ------------------------------------------------------------------
# Full inv_freq buffer (PyTorch register_buffer layout) — reference only.
# ------------------------------------------------------------------
def build_pixtral_inv_freq(head_dim: int, rope_theta: float,
                           image_size: int, patch_size: int) -> jnp.ndarray:
    dim = head_dim
    p = image_size // patch_size
    freqs = 1.0 / (rope_theta ** (jnp.arange(0, dim, 2, dtype=jnp.float32) / dim))
    h = jnp.arange(p, dtype=jnp.float32)
    w = jnp.arange(p, dtype=jnp.float32)
    freqs_h = jnp.outer(h, freqs[0::2])          # (P, dim//4)
    freqs_w = jnp.outer(w, freqs[1::2])          # (P, dim//4)
    half = jnp.concatenate(
        [jnp.tile(freqs_h[:, None, :], (1, p, 1)),
         jnp.tile(freqs_w[None, :, :], (p, 1, 1))],
        axis=-1,
    ).reshape(-1, dim // 2)                      # (P*P, dim//2)
    return jnp.concatenate([half, half], axis=-1).astype(jnp.float32)


# ------------------------------------------------------------------
# Kernel: freqs = h*base_h + w*base_w (f32), cos/sin on dim//2 lanes,
# duplicated to dim lanes, stored as two direct outputs.
# ------------------------------------------------------------------
def _pixtral_rope_kernel(h_ref, w_ref, bh_ref, bw_ref, cos_ref, sin_ref):
    # h_ref, w_ref : (TQ, 1)        f32 — decoded patch row / column indices
    # bh_ref       : (1, dim_half)  f32 — [freqs_even | 0]
    # bw_ref       : (1, dim_half)  f32 — [0 | freqs_odd]
    # cos_ref/sin_ref : (TQ, dim)   out_dtype
    freqs = h_ref[...] * bh_ref[...] + w_ref[...] * bw_ref[...]   # (TQ, dim_half)
    cos_h = jnp.cos(freqs)
    sin_h = jnp.sin(freqs)
    cos_ref[...] = jnp.concatenate([cos_h, cos_h], axis=-1).astype(cos_ref.dtype)
    sin_ref[...] = jnp.concatenate([sin_h, sin_h], axis=-1).astype(sin_ref.dtype)


@functools.partial(jax.jit,
                   static_argnames=("patches_per_side", "out_dtype", "tile_q"))
def pixtral_rope_pallas(base_h: jnp.ndarray,
                        base_w: jnp.ndarray,
                        position_ids: jnp.ndarray,
                        patches_per_side: int,
                        out_dtype,
                        tile_q: int = 512):
    """cos, sin = cos/sin(inv_freq[position_ids]) cast to out_dtype."""
    dim_half = base_h.shape[-1]
    dim = 2 * dim_half
    ids_shape = position_ids.shape
    flat = position_ids.reshape(-1).astype(jnp.int32)
    seq = flat.shape[0]

    # Decode Pixtral position ids (id = h*P + w) outside the kernel.
    h_idx = flat // patches_per_side
    w_idx = flat - h_idx * patches_per_side

    # Tile the position axis; ensure >=2 grid steps when possible (v7x megacore).
    seq8 = _round_up(max(seq, 1), 8)
    tq = min(int(tile_q), seq8)
    if seq8 >= 16 and seq8 <= tq:
        tq = _round_up(seq8 // 2, 8)
    padded = _round_up(seq8, tq)
    num_tiles = padded // tq

    hf = jnp.zeros((padded, 1), jnp.float32).at[:seq, 0].set(
        h_idx.astype(jnp.float32))
    wf = jnp.zeros((padded, 1), jnp.float32).at[:seq, 0].set(
        w_idx.astype(jnp.float32))

    cos_p, sin_p = pl.pallas_call(
        _pixtral_rope_kernel,
        grid_spec=pltpu.PrefetchScalarGridSpec(
            num_scalar_prefetch=0,
            grid=(num_tiles,),
            in_specs=[
                pl.BlockSpec((tq, 1), lambda i: (i, 0)),           # h
                pl.BlockSpec((tq, 1), lambda i: (i, 0)),           # w
                pl.BlockSpec((1, dim_half), lambda i: (0, 0)),     # base_h (resident)
                pl.BlockSpec((1, dim_half), lambda i: (0, 0)),     # base_w (resident)
            ],
            out_specs=[
                pl.BlockSpec((tq, dim), lambda i: (i, 0)),         # cos
                pl.BlockSpec((tq, dim), lambda i: (i, 0)),         # sin
            ],
        ),
        out_shape=(jax.ShapeDtypeStruct((padded, dim), out_dtype),
                   jax.ShapeDtypeStruct((padded, dim), out_dtype)),
        compiler_params=pltpu.CompilerParams(
            dimension_semantics=("parallel",)),
    )(hf, wf, base_h, base_w)

    if padded != seq:
        cos_p = cos_p[:seq]
        sin_p = sin_p[:seq]
    cos = cos_p.reshape(ids_shape + (dim,))
    sin = sin_p.reshape(ids_shape + (dim,))
    return cos, sin


# ------------------------------------------------------------------
# Module-style wrapper
# ------------------------------------------------------------------
class PixtralRotaryEmbeddingPallas:
    def __init__(self, head_dim, rope_theta, image_size, patch_size):
        self.dim = head_dim
        self.patches_per_side = image_size // patch_size
        freqs = 1.0 / (rope_theta ** (
            jnp.arange(0, head_dim, 2, dtype=jnp.float32) / head_dim))
        fe = freqs[0::2]                       # base freqs for the h component
        fo = freqs[1::2]                       # base freqs for the w component
        # Zero-padded into their half of the dim//2 lane range so the kernel can
        # do a single fused  h*base_h + w*base_w  over dim//2 lanes.
        self.base_h = jnp.concatenate([fe, jnp.zeros_like(fo)])[None, :]
        self.base_w = jnp.concatenate([jnp.zeros_like(fe), fo])[None, :]
        # Full PyTorch-layout buffer — kept only as a correctness reference.
        self.inv_freq = build_pixtral_inv_freq(
            head_dim, rope_theta, image_size, patch_size)
        # TODO(synk): '_dynamic_frequency_update' is not implemented — the
        # module uses rope_type='default', so that branch is never taken.

    def __call__(self, x, position_ids):
        # x only supplies the output dtype (as in the PyTorch forward).
        return pixtral_rope_pallas(self.base_h, self.base_w, position_ids,
                                   self.patches_per_side, x.dtype)


if __name__ == "__main__":
    # Small deterministic config: head_dim=64, theta=10000, image 128 / patch 16
    # -> max_patches_per_side = 8 -> 64 valid positions.
    head_dim = 64
    rope_theta = 10000.0
    image_size = 128
    patch_size = 16
    max_positions = (image_size // patch_size) ** 2  # 64

    batch, seq, hidden = 2, 8, 32

    key = jax.random.PRNGKey(0)
    k_x, k_p1, k_p2 = jax.random.split(key, 3)
    x = jax.random.normal(k_x, (batch, seq, hidden), dtype=jnp.float32).astype(
        jnp.bfloat16)
    position_ids = jax.random.randint(
        k_p1, (seq,), minval=0, maxval=max_positions, dtype=jnp.int32)

    rope = PixtralRotaryEmbeddingPallas(head_dim, rope_theta, image_size, patch_size)
    cos, sin = jax.block_until_ready(rope(x, position_ids))

    # Pure-JAX reference of the PyTorch forward (table gather + cos/sin).
    freqs_ref = rope.inv_freq[position_ids]
    cos_ref = jnp.cos(freqs_ref).astype(x.dtype)
    sin_ref = jnp.sin(freqs_ref).astype(x.dtype)

    assert cos.shape == (seq, head_dim) and sin.shape == (seq, head_dim)
    assert cos.dtype == x.dtype and sin.dtype == x.dtype
    assert jnp.allclose(cos.astype(jnp.float32), cos_ref.astype(jnp.float32),
                        atol=1e-2, rtol=1e-2)
    assert jnp.allclose(sin.astype(jnp.float32), sin_ref.astype(jnp.float32),
                        atol=1e-2, rtol=1e-2)

    # Second check: batched, non-multiple-of-8 ids (exercises multi-tile + padding).
    pos2 = jax.random.randint(
        k_p2, (2, 30), minval=0, maxval=max_positions, dtype=jnp.int32)
    cos2, sin2 = jax.block_until_ready(rope(x, pos2))
    freqs2 = rope.inv_freq[pos2]
    assert cos2.shape == (2, 30, head_dim) and sin2.shape == (2, 30, head_dim)
    assert jnp.allclose(cos2.astype(jnp.float32), jnp.cos(freqs2),
                        atol=1e-2, rtol=1e-2)
    assert jnp.allclose(sin2.astype(jnp.float32), jnp.sin(freqs2),
                        atol=1e-2, rtol=1e-2)

    print("KERNEL_OK")
</pallas_src>

<mosaic_0001>
module attributes {stable_mosaic.version = 11 : i64} {
  func.func @_pixtral_rope_kernel(%arg0: i32, %arg1: memref<8x1xf32, #tpu.memory_space<vmem>>, %arg2: memref<8x1xf32, #tpu.memory_space<vmem>>, %arg3: memref<1x32xf32, #tpu.memory_space<vmem>>, %arg4: memref<1x32xf32, #tpu.memory_space<vmem>>, %arg5: memref<8x64xbf16, #tpu.memory_space<vmem>>, %arg6: memref<8x64xbf16, #tpu.memory_space<vmem>>) attributes {dimension_semantics = [#tpu.dimension_semantics<parallel>], iteration_bounds = array<i64: 1>, scalar_prefetch = 0 : i64, scratch_operands = 0 : i64, tpu.core_type = #tpu.core_type<tc>, window_params = [{transform_indices = @transform_0, window_bounds = array<i64: 8, 1>}, {transform_indices = @transform_1, window_bounds = array<i64: 8, 1>}, {pipeline_mode = #tpu.pipeline_mode<synchronous>, transform_indices = @transform_2, window_bounds = array<i64: 1, 32>}, {pipeline_mode = #tpu.pipeline_mode<synchronous>, transform_indices = @transform_3, window_bounds = array<i64: 1, 32>}, {transform_indices = @transform_4, window_bounds = array<i64: 8, 64>}, {transform_indices = @transform_5, window_bounds = array<i64: 8, 64>}]} {
    %c0 = arith.constant 0 : index
    %c0_0 = arith.constant 0 : index
    %0 = vector.load %arg1[%c0, %c0_0] : memref<8x1xf32, #tpu.memory_space<vmem>>, vector<8x1xf32>
    %c0_1 = arith.constant 0 : index
    %c0_2 = arith.constant 0 : index
    %1 = vector.load %arg3[%c0_1, %c0_2] : memref<1x32xf32, #tpu.memory_space<vmem>>, vector<1x32xf32>
    %2 = vector.broadcast %0 : vector<8x1xf32> to vector<8x32xf32>
    %3 = vector.broadcast %1 : vector<1x32xf32> to vector<8x32xf32>
    %4 = arith.mulf %2, %3 : vector<8x32xf32>
    %c0_3 = arith.constant 0 : index
    %c0_4 = arith.constant 0 : index
    %5 = vector.load %arg2[%c0_3, %c0_4] : memref<8x1xf32, #tpu.memory_space<vmem>>, vector<8x1xf32>
    %c0_5 = arith.constant 0 : index
    %c0_6 = arith.constant 0 : index
    %6 = vector.load %arg4[%c0_5, %c0_6] : memref<1x32xf32, #tpu.memory_space<vmem>>, vector<1x32xf32>
    %7 = vector.broadcast %5 : vector<8x1xf32> to vector<8x32xf32>
    %8 = vector.broadcast %6 : vector<1x32xf32> to vector<8x32xf32>
    %9 = arith.mulf %7, %8 : vector<8x32xf32>
    %10 = arith.addf %4, %9 : vector<8x32xf32>
    %11 = math.cos %10 : vector<8x32xf32>
    %12 = math.sin %10 : vector<8x32xf32>
    %13 = tpu.concatenate %11, %11 in 1 : vector<8x32xf32>, vector<8x32xf32> -> vector<8x64xf32>
    %14 = arith.truncf %13 : vector<8x64xf32> to vector<8x64xbf16>
    %c0_7 = arith.constant 0 : index
    %c0_8 = arith.constant 0 : index
    %15 = vector.load %arg5[%c0_7, %c0_8] : memref<8x64xbf16, #tpu.memory_space<vmem>>, vector<8x64xbf16>
    tpu.vector_store %arg5[%c0_7, %c0_8], %14 {strides = array<i32>} : memref<8x64xbf16, #tpu.memory_space<vmem>>, vector<8x64xbf16>,
    %16 = tpu.concatenate %12, %12 in 1 : vector<8x32xf32>, vector<8x32xf32> -> vector<8x64xf32>
    %17 = arith.truncf %16 : vector<8x64xf32> to vector<8x64xbf16>
    %c0_9 = arith.constant 0 : index
    %c0_10 = arith.constant 0 : index
    %18 = vector.load %arg6[%c0_9, %c0_10] : memref<8x64xbf16, #tpu.memory_space<vmem>>, vector<8x64xbf16>
    tpu.vector_store %arg6[%c0_9, %c0_10], %17 {strides = array<i32>} : memref<8x64xbf16, #tpu.memory_space<vmem>>, vector<8x64xbf16>,
    return
  }
  func.func @transform_0(%arg0: i32) -> (i32, i32) {
    %c0_i32 = arith.constant 0 : i32
    %c0_i32_0 = arith.constant 0 : i32
    return %arg0, %c0_i32 : i32, i32
  }
  func.func @transform_1(%arg0: i32) -> (i32, i32) {
    %c0_i32 = arith.constant 0 : i32
    %c0_i32_0 = arith.constant 0 : i32
    return %arg0, %c0_i32 : i32, i32
  }
  func.func @transform_2(%arg0: i32) -> (i32, i32) {
    %c0_i32 = arith.constant 0 : i32
    %c0_i32_0 = arith.constant 0 : i32
    %c0_i32_1 = arith.constant 0 : i32
    return %c0_i32, %c0_i32_0 : i32, i32
  }
  func.func @transform_3(%arg0: i32) -> (i32, i32) {
    %c0_i32 = arith.constant 0 : i32
    %c0_i32_0 = arith.constant 0 : i32
    %c0_i32_1 = arith.constant 0 : i32
    return %c0_i32, %c0_i32_0 : i32, i32
  }
  func.func @transform_4(%arg0: i32) -> (i32, i32) {
    %c0_i32 = arith.constant 0 : i32
    %c0_i32_0 = arith.constant 0 : i32
    return %arg0, %c0_i32 : i32, i32
  }
  func.func @transform_5(%arg0: i32) -> (i32, i32) {
    %c0_i32 = arith.constant 0 : i32
    %c0_i32_0 = arith.constant 0 : i32
    return %arg0, %c0_i32 : i32, i32
  }
}

</mosaic_0001>

<llo_original>
// kernel: pixtral_rope_pallas.1
$region0: #{pixtral_rope_pallas.1}
  #allocation0 [shape = 'u32[]', space=smem, size = 0x4, offset = 0x4, fixed_abs, tag = 'smem constant byte address 0x4 - core index']
  #allocation1 [shape = 'u32[144,128]{1,0:T(1,128)}', space=vmem, size = 0x12000, scoped, tag = 'internal scratch']
  %s0 = inlined_call_operand.vmem [shape: f32[8,1], index: 0, kind: input, shape index: {}]
  %s1 = inlined_call_operand.vmem [shape: f32[8,1], index: 1, kind: input, shape index: {}]
  %s2 = inlined_call_operand.vmem [shape: f32[1,32], index: 2, kind: input, shape index: {}]
  %s3 = inlined_call_operand.vmem [shape: f32[1,32], index: 3, kind: input, shape index: {}]
  %s4 = inlined_call_operand.hbm [shape: bf16[8,64], index: 4, kind: output, shape index: {0}]
  %s5 = inlined_call_operand.hbm [shape: bf16[8,64], index: 5, kind: output, shape index: {1}]
  %6 = xla_tuple %s4, %s5
  %s7 = sld [smem:[#allocation0]]
  $region34: #{pixtral_rope_pallas.1} parent=0
    _
  %s9 = ssub.s32 1, %s7
  %s10 = scalar_select 0, %s9, %s7
  $region1: #{pixtral_rope_pallas.1} parent=0
    #allocation2 [shape = 'u8[2048]{0}', space=vmem, size = 0x800, scoped, tag = 'output window, operand 0, single buffered']
    #allocation3 [shape = 's32[1]{0}', space=sflag, size = 0x4, scoped, tag = 'scoped memory for pixtral_rope_pallas.1']
    #allocation4 [shape = 'u8[2048]{0}', space=vmem, size = 0x800, scoped, tag = 'output window, operand 1, single buffered']
    #allocation5 [shape = 's32[1]{0}', space=sflag, size = 0x4, scoped, tag = 'scoped memory for pixtral_rope_pallas.1']
    %11 = vsyncpa [#allocation3], 0
    %12 = vsyncpa [#allocation5], 0
    // Predicated region
    $region2: #{pixtral_rope_pallas.1} parent=1 // pred_check
      _
    $region3: #{pixtral_rope_pallas.1} parent=1 // pred_check_branch
      %14 = sbr.rel (0) target = $region5
    $region4: #{pixtral_rope_pallas.1} parent=1 // pred_region
      _
    $region5: #{pixtral_rope_pallas.1} parent=1 // pred_fallthru
      _
    // Predicated region
    $region6: #{pixtral_rope_pallas.1} parent=1 // pred_check
      _
    $region7: #{pixtral_rope_pallas.1} parent=1 // pred_check_branch
      %16 = sbr.rel (0) target = $region9
    $region8: #{pixtral_rope_pallas.1} parent=1 // pred_region
      _
    $region9: #{pixtral_rope_pallas.1} parent=1 // pred_fallthru
      _
    // Predicated region
    $region10: #{pixtral_rope_pallas.1} parent=1 // pred_check
      _
    $region11: #{pixtral_rope_pallas.1} parent=1 // pred_check_branch
      %18 = sbr.rel (0) target = $region13
    $region12: #{pixtral_rope_pallas.1} parent=1 // pred_region
      _
    $region13: #{pixtral_rope_pallas.1} parent=1 // pred_fallthru
      _
    // Predicated region
    $region14: #{pixtral_rope_pallas.1} parent=1 // pred_check
      _
    $region15: #{pixtral_rope_pallas.1} parent=1 // pred_check_branch
      %20 = sbr.rel (0) target = $region17
    $region16: #{pixtral_rope_pallas.1} parent=1 // pred_region
      _
    $region17: #{pixtral_rope_pallas.1} parent=1 // pred_fallthru
      _
    %v21 = vld [vmem:[%s0] sm:$0xff]
    %v22 = vld [vmem:[%s2] sm:$0x1]
    %24 = vset.pattern.permute.xlu0 0
    %25 = vperm.xlu0 %24, %v21
    %v26 = vpop.permute.xlu0 %25
    %v29 = vlaneseq
    %v30 = vshrl.u32 %v29, 7
    %v31 = vsub.s32 0, %v30
    %v32 = vrot.slane %v22, %v31
    %v34 = vmul.f32 %v26, %v32
    %v35 = vld [vmem:[%s1] sm:$0xff]
    %v36 = vld [vmem:[%s3] sm:$0x1]
    %38 = vset.pattern.permute.xlu0 0
    %39 = vperm.xlu0 %38, %v35
    %v40 = vpop.permute.xlu0 %39
    %v43 = vlaneseq
    %v44 = vshrl.u32 %v43, 7
    %v45 = vsub.s32 0, %v44
    %v46 = vrot.slane %v36, %v45
    %v48 = vmul.f32 %v40, %v46
    %v49 = vadd.f32 %v34, %v48
    %v50 = vand.u32 2147483647, %v49
    %vm51 = vcmp.le.f32.partialorder %v50, 0.7853982
    %vm52 = vcmp.lt.s32.totalorder %v49, 0
    %v53 = vand.u32 %v49, 2139095040
    %v54 = vshrl.u32 %v53, 23
    %v55 = vsub.s32 %v54, 127
    %v56 = vand.u32 2147483647, %v49
    %v57 = vand.u32 %v56, 8388607
    %v58 = vor.u32 %v57, 8388608
    %v59 = vsub.s32 0, %v58
    %v60 = vadd.s32 %v55, 1
    %vm61 = vcmp.gt.s32.totalorder %v60, 0
    %v62 = vsel %vm61, %v60, 0
    %v63 = vshrl.u32 %v62, 5
    %v64 = vand.u32 %v62, 31
    %v65 = vsub.s32 32, %v64
    %v66 = vshrl.u32 683565275, %v65
    %v67 = vshll.u32 683565275, %v64
    %v68 = vshrl.u32 2475754826, %v65
    %v69 = vor.u32 %v67, %v68
    %v70 = vshll.u32 2475754826, %v64
    %v71 = vshrl.u32 2131351028, %v65
    %v72 = vor.u32 %v70, %v71
    %v73 = vshll.u32 2131351028, %v64
    %v74 = vshrl.u32 2102212464, %v65
    %v75 = vor.u32 %v73, %v74
    %v76 = vshll.u32 2102212464, %v64
    %v77 = vshrl.u32 920167782, %v65
    %v78 = vor.u32 %v76, %v77
    %v79 = vshll.u32 920167782, %v64
    %v80 = vshrl.u32 1326507024, %v65
    %v81 = vor.u32 %v79, %v80
    %vm82 = vcmp.lt.s32.totalorder %v63, 1
    %vm83 = vcmp.lt.s32.totalorder %v63, 2
    %vm84 = vcmp.lt.s32.totalorder %v63, 3
    %vm85 = vcmp.lt.s32.totalorder %v63, 4
    %v86 = vsel %vm82, %v66, %v69
    %v87 = vsel %vm85, %v75, 2102212464
    %v88 = vsel %vm84, %v72, %v87
    %v89 = vsel %vm83, %v86, %v88
    %v90 = vsel %vm82, %v69, %v72
    %v91 = vsel %vm85, %v78, 920167782
    %v92 = vsel %vm84, %v75, %v91
    %v93 = vsel %vm83, %v90, %v92
    %v94 = vsel %vm82, %v72, %v75
    %v95 = vsel %vm85, %v81, 1326507024
    %v96 = vsel %vm84, %v78, %v95
    %v97 = vsel %vm83, %v94, %v96
    %v98 = vshll.u32 %v58, 8
    %v99 = vmul.u32.u64.compose %v98, %v97
    %v100 = vextract.low.u32 %v99
    %v101 = vextract.high.u32 %v99
    %v102 = vmul.u32.u64.compose %v98, %v93
    %v103 = vextract.low.u32 %v102
    %v104 = vextract.high.u32 %v102
    %v105 = vmul.u32 %v98, %v89
    %v106 = vadd.s32 %v101, %v103
    %vm107 = vc.u32 %v101, %v103
    %v108 = vadd.s32 %v104, 1
    %v109 = vsel %vm107, %v108, %v104
    %v110 = vadd.s32 %v105, %v109
    %v111 = vadd.s32 %v110, 536870912
    %v112 = vshrl.u32 %v111, 30
    %v113 = vshll.u32 %v112, 30
    %v114 = vsub.s32 %v110, %v113
    %vm115 = vcmp.lt.s32.totalorder %v114, 0
    %v116 = vsub.s32 0, %v114
    %v117 = vsel %vm115, %v116, %v114
    %v118 = vclz %v117
    %v119 = vsub.s32 %v118, 2
    %vm120 = vcmp.gt.s32.totalorder 0, %v119
    %v121 = vsel %vm120, 0, %v119
    %v122 = vsub.s32 32, %v121
    %v123 = vshll.u32 %v114, %v121
    %v124 = vshrl.u32 %v106, %v122
    %v125 = vor.u32 %v123, %v124
    %v126 = vsub.s32 4294967266, %v121
    %v127 = vadd.s32 %v126, 127
    %v128 = vshll.u32 %v127, 23
    %v129 = vor.u32 4788187, %v128
    %v130 = vand.u32 2147483647, %v129
    %v132 = vcvt.s32.f32 %v125
    %v133 = vmul.f32 %v132, %v130
    %v134 = vxor.u32 %v133, 2147483648
    %v135 = vsel %vm52, %v134, %v133
    %v136 = vsub.s32 4, %v112
    %v137 = vsel %vm52, %v136, %v112
    %v138 = vsel %vm51, %v49, %v135
    %v139 = vsel %vm51, 0, %v137
    %v140 = vcosq.f32.pop %v138
    %v141 = vsinq.f32.pop %v138
    %vm142 = vweird.f32 %v49
    %v143 = vand.u32 %v139, 3
    %vm144 = vcmp.lt.s32.totalorder %v143, 2
    %vm145 = vcmp.eq.s32.totalorder %v143, 0
    %v146 = vxor.u32 %v141, 2147483648
    %v147 = vsel %vm145, %v140, %v146
    %vm148 = vcmp.eq.s32.totalorder %v143, 2
    %v149 = vxor.u32 %v140, 2147483648
    %v150 = vsel %vm148, %v149, %v141
    %v151 = vsel %vm144, %v147, %v150
    %v152 = vsel %vm142, nan, %v151
    %v153 = vand.u32 2147483647, %v49
    %vm154 = vcmp.le.f32.partialorder %v153, 0.7853982
    %vm155 = vcmp.lt.s32.totalorder %v49, 0
    %v156 = vand.u32 %v49, 2139095040
    %v157 = vshrl.u32 %v156, 23
    %v158 = vsub.s32 %v157, 127
    %v159 = vand.u32 2147483647, %v49
    %v160 = vand.u32 %v159, 8388607
    %v161 = vor.u32 %v160, 8388608
    %v162 = vsub.s32 0, %v161
    %v163 = vadd.s32 %v158, 1
    %vm164 = vcmp.gt.s32.totalorder %v163, 0
    %v165 = vsel %vm164, %v163, 0
    %v166 = vshrl.u32 %v165, 5
    %v167 = vand.u32 %v165, 31
    %v168 = vsub.s32 32, %v167
    %v169 = vshrl.u32 683565275, %v168
    %v170 = vshll.u32 683565275, %v167
    %v171 = vshrl.u32 2475754826, %v168
    %v172 = vor.u32 %v170, %v171
    %v173 = vshll.u32 2475754826, %v167
    %v174 = vshrl.u32 2131351028, %v168
    %v175 = vor.u32 %v173, %v174
    %v176 = vshll.u32 2131351028, %v167
    %v177 = vshrl.u32 2102212464, %v168
    %v178 = vor.u32 %v176, %v177
    %v179 = vshll.u32 2102212464, %v167
    %v180 = vshrl.u32 920167782, %v168
    %v181 = vor.u32 %v179, %v180
    %v182 = vshll.u32 920167782, %v167
    %v183 = vshrl.u32 1326507024, %v168
    %v184 = vor.u32 %v182, %v183
    %vm185 = vcmp.lt.s32.totalorder %v166, 1
    %vm186 = vcmp.lt.s32.totalorder %v166, 2
    %vm187 = vcmp.lt.s32.totalorder %v166, 3
    %vm188 = vcmp.lt.s32.totalorder %v166, 4
    %v189 = vsel %vm185, %v169, %v172
    %v190 = vsel %vm188, %v178, 2102212464
    %v191 = vsel %vm187, %v175, %v190
    %v192 = vsel %vm186, %v189, %v191
    %v193 = vsel %vm185, %v172, %v175
    %v194 = vsel %vm188, %v181, 920167782
    %v195 = vsel %vm187, %v178, %v194
    %v196 = vsel %vm186, %v193, %v195
    %v197 = vsel %vm185, %v175, %v178
    %v198 = vsel %vm188, %v184, 1326507024
    %v199 = vsel %vm187, %v181, %v198
    %v200 = vsel %vm186, %v197, %v199
    %v201 = vshll.u32 %v161, 8
    %v202 = vmul.u32.u64.compose %v201, %v200
    %v203 = vextract.low.u32 %v202
    %v204 = vextract.high.u32 %v202
    %v205 = vmul.u32.u64.compose %v201, %v196
    %v206 = vextract.low.u32 %v205
    %v207 = vextract.high.u32 %v205
    %v208 = vmul.u32 %v201, %v192
    %v209 = vadd.s32 %v204, %v206
    %vm210 = vc.u32 %v204, %v206
    %v211 = vadd.s32 %v207, 1
    %v212 = vsel %vm210, %v211, %v207
    %v213 = vadd.s32 %v208, %v212
    %v214 = vadd.s32 %v213, 536870912
    %v215 = vshrl.u32 %v214, 30
    %v216 = vshll.u32 %v215, 30
    %v217 = vsub.s32 %v213, %v216
    %vm218 = vcmp.lt.s32.totalorder %v217, 0
    %v219 = vsub.s32 0, %v217
    %v220 = vsel %vm218, %v219, %v217
    %v221 = vclz %v220
    %v222 = vsub.s32 %v221, 2
    %vm223 = vcmp.gt.s32.totalorder 0, %v222
    %v224 = vsel %vm223, 0, %v222
    %v225 = vsub.s32 32, %v224
    %v226 = vshll.u32 %v217, %v224
    %v227 = vshrl.u32 %v209, %v225
    %v228 = vor.u32 %v226, %v227
    %v229 = vsub.s32 4294967266, %v224
    %v230 = vadd.s32 %v229, 127
    %v231 = vshll.u32 %v230, 23
    %v232 = vor.u32 4788187, %v231
    %v233 = vand.u32 2147483647, %v232
    %v235 = vcvt.s32.f32 %v228
    %v236 = vmul.f32 %v235, %v233
    %v237 = vxor.u32 %v236, 2147483648
    %v238 = vsel %vm155, %v237, %v236
    %v239 = vsub.s32 4, %v215
    %v240 = vsel %vm155, %v239, %v215
    %v241 = vsel %vm154, %v49, %v238
    %v242 = vsel %vm154, 0, %v240
    %v243 = vcosq.f32.pop %v241
    %v244 = vsinq.f32.pop %v241
    %vm245 = vweird.f32 %v49
    %v246 = vadd.s32 %v242, 3
    %v247 = vand.u32 %v246, 3
    %vm248 = vcmp.lt.s32.totalorder %v247, 2
    %vm249 = vcmp.eq.s32.totalorder %v247, 0
    %v250 = vxor.u32 %v244, 2147483648
    %v251 = vsel %vm249, %v243, %v250
    %vm252 = vcmp.eq.s32.totalorder %v247, 2
    %v253 = vxor.u32 %v243, 2147483648
    %v254 = vsel %vm252, %v253, %v244
    %v255 = vsel %vm248, %v251, %v254
    %v256 = vsel %vm245, nan, %v255
    %258 = vrot.lane.b32.xlu0 %v152, 32
    %v259 = vpop.permute.xlu0 %258
    %vm261 = vcmask 261120
    %v262 = vsel %vm261, %v152, %v259
    %v263 = vpack.c.bf16 %v262, %v262
    %vm264 = vcmask 519168
    %265 = vst.msk [vmem:[#allocation2] sm:$0xf] %vm264, %v263
    %267 = vrot.lane.b32.xlu0 %v256, 32
    %v268 = vpop.permute.xlu0 %267
    %v270 = vsel %vm261, %v256, %v268
    %v271 = vpack.c.bf16 %v270, %v270
    %272 = vst.msk [vmem:[#allocation4] sm:$0xf] %vm264, %v271
    // Predicated region
    $region18: #{pixtral_rope_pallas.1} parent=1 // pred_check
      _
    $region19: #{pixtral_rope_pallas.1} parent=1 // pred_check_branch
      %274 = sbr.rel (0) target = $region21
    $region20: #{pixtral_rope_pallas.1} parent=1 // pred_region
      %s276 = ssub.s32 64, 64
      %277 = vsyncadd [#allocation3], %s276
      %s279 = sshll.u32 [#allocation2], 4
      %s280 = int_to_ptr.vmem [resolvable:$true] %s279
      %282 = dma.vmem_to_hbm [thread:$0]  %s280, 64, %s4, [#allocation3]
    $region21: #{pixtral_rope_pallas.1} parent=1 // pred_fallthru
      _
    // Predicated region
    $region22: #{pixtral_rope_pallas.1} parent=1 // pred_check
      _
    $region23: #{pixtral_rope_pallas.1} parent=1 // pred_check_branch
      %284 = sbr.rel (0) target = $region25
    $region24: #{pixtral_rope_pallas.1} parent=1 // pred_region
      %s286 = ssub.s32 64, 64
      %287 = vsyncadd [#allocation5], %s286
      %s289 = sshll.u32 [#allocation4], 4
      %s290 = int_to_ptr.vmem [resolvable:$true] %s289
      %292 = dma.vmem_to_hbm [thread:$0]  %s290, 64, %s5, [#allocation5]
    $region25: #{pixtral_rope_pallas.1} parent=1 // pred_fallthru
      _
    // Predicated region
    $region26: #{pixtral_rope_pallas.1} parent=1 // pred_check
      _
    $region27: #{pixtral_rope_pallas.1} parent=1 // pred_check_branch
      %294 = sbr.rel (0) target = $region29
    $region28: #{pixtral_rope_pallas.1} parent=1 // pred_region
      %295 = dma.done [#allocation3], 64
    $region29: #{pixtral_rope_pallas.1} parent=1 // pred_fallthru
      _
    // Predicated region
    $region30: #{pixtral_rope_pallas.1} parent=1 // pred_check
      _
    $region31: #{pixtral_rope_pallas.1} parent=1 // pred_check_branch
      %297 = sbr.rel (0) target = $region33
    $region32: #{pixtral_rope_pallas.1} parent=1 // pred_region
      %298 = dma.done [#allocation5], 64
    $region33: #{pixtral_rope_pallas.1} parent=1 // pred_fallthru
      _
    %299 = vsyncpa [#allocation3], 1
    %300 = vsyncpa [#allocation5], 1

</llo_original>
